<compile_context>
chip_gen: v5e
topology: v5e:2x2
jax: 0.10.0
libtpu: 0.0.40
codegen_flags: <defaults>
</compile_context>

<pallas_src>
import functools

import jax
import jax.numpy as jnp
from jax.experimental import pallas as pl
from jax.experimental.pallas import tpu as pltpu


def _layernorm_kernel(x_ref, gamma_ref, beta_ref, o_ref, *, eps, n_features):
    # Plain path: one logical row per block row.
    # x_ref: (tile_rows, F)   gamma/beta: (1, F) f32   o_ref: (tile_rows, F)
    x = x_ref[...].astype(jnp.float32)
    mean = jnp.mean(x, axis=-1, keepdims=True)
    diff = x - mean
    # torch.std default is unbiased -> divide by (N - 1).
    var = jnp.sum(diff * diff, axis=-1, keepdims=True) * jnp.float32(
        1.0 / (n_features - 1))
    std = jnp.sqrt(var)
    # approx=False keeps f32 accuracy (mem-bound kernel; cost hidden by DMA).
    inv = pl.reciprocal(std + jnp.float32(eps), approx=False)
    o_ref[...] = (gamma_ref[...] * (diff * inv) + beta_ref[...]).astype(o_ref.dtype)


def _layernorm_packed_kernel(x_ref, gamma_ref, beta_ref, seg_ref, o_ref, *,
                             eps, n_features):
    # Lane-packed path: each block row holds k = 128 // F original rows.
    # seg_ref is a (128, 128) block-diagonal ones matrix, so  x @ seg  yields
    # per-segment sums broadcast back across each F-lane segment (one MXU op).
    # Segments never cross packed rows -> ragged last block stays safe.
    x = x_ref[...].astype(jnp.float32)
    seg = seg_ref[...]
    hi = jax.lax.Precision.HIGHEST  # keep f32 accuracy for the segment sums
    sum_b = jnp.dot(x, seg, preferred_element_type=jnp.float32, precision=hi)
    mean_b = sum_b * jnp.float32(1.0 / n_features)
    diff = x - mean_b
    var_b = jnp.dot(diff * diff, seg, preferred_element_type=jnp.float32,
                    precision=hi) * jnp.float32(1.0 / (n_features - 1))
    std = jnp.sqrt(var_b)
    inv = pl.reciprocal(std + jnp.float32(eps), approx=False)
    o_ref[...] = (gamma_ref[...] * (diff * inv) + beta_ref[...]).astype(o_ref.dtype)


def _vmem_capacity_bytes():
    try:
        return int(pltpu.get_tpu_info().vmem_capacity_bytes)
    except Exception:
        return 64 << 20  # conservative fallback (v7x per-TC VMEM)


def _choose_tile_rows(n_rows, n_lane_features, dtype, vmem_capacity_bytes):
    """Row tile sized by LANE-PADDED block bytes, generation aware."""
    itemsize = jnp.dtype(dtype).itemsize
    # sublane pack factor: f32 -> 8, bf16/f16 -> 16, int8/fp8 -> 32
    pack = {4: 8, 2: 16, 1: 32}.get(itemsize, 8)
    # VMEM footprint uses the lane-padded width (last dim padded to 128 lanes).
    padded_f = max(-(-n_lane_features // 128) * 128, 128)
    bytes_per_row = padded_f * itemsize

    small_vmem = vmem_capacity_bytes <= (80 << 20)  # v7x: 64 MiB per TC
    target_bytes = (2 << 20) if small_vmem else (4 << 20)
    max_block_bytes = (4 << 20) if small_vmem else (8 << 20)

    min_rows = min(pack, n_rows)
    if min_rows * bytes_per_row > max_block_bytes:
        # TODO(synk): split the feature axis over an "arbitrary" grid dim with
        # VMEM accumulators (two-pass / Welford) for very large F.
        raise ValueError(
            f"features={n_lane_features} too large for a single VMEM block "
            f"({min_rows * bytes_per_row} B > {max_block_bytes} B budget)")

    if n_rows <= pack:
        return int(n_rows)  # single full-array block (allowed even if < 8 rows)

    tr = max(pack, target_bytes // bytes_per_row)
    tr = min(tr, max(pack, max_block_bytes // bytes_per_row))
    # Keep the grid at >= ~8 steps when possible so the row axis shards across
    # both TensorCores on v7x and the DMA pipeline has work to overlap.
    rows_for_steps = -(-n_rows // 8)
    rows_for_steps = -(-rows_for_steps // pack) * pack
    tr = min(tr, max(pack, rows_for_steps))
    # Never exceed the array's own row extent (round DOWN to the pack factor;
    # the standard ragged last block handles the remainder).
    rows_floor = (n_rows // pack) * pack
    tr = min(tr, rows_floor)
    tr = max(pack, (tr // pack) * pack)
    return int(tr)


def layer_norm(x, gamma, beta, eps=1e-6, *, tile_rows=None):
    """LayerNorm over the last axis. x: (..., F); gamma, beta: (F,)."""
    orig_shape = x.shape
    F = orig_shape[-1]
    if F < 2:
        raise ValueError("Unbiased std (torch default) requires features >= 2; "
                         "features == 1 would be a silent NaN.")
    x2 = x.reshape(-1, F)
    R = x2.shape[0]

    vmem_cap = _vmem_capacity_bytes()
    small_vmem = vmem_cap <= (80 << 20)
    vmem_limit = (40 << 20) if small_vmem else (64 << 20)

    # Lane-pack small F: fold k = 128 // F logical rows into one 128-lane row.
    k = 128 // F if (F < 128 and 128 % F == 0) else 1
    use_packed = (k > 1) and (R % k == 0)

    itemsize = jnp.dtype(x2.dtype).itemsize
    flops = 10 * R * F + (4 * 128 * 128 * (R // k) if use_packed else 0)
    cost = pl.CostEstimate(
        flops=int(flops),
        transcendentals=int(2 * R),
        bytes_accessed=int(2 * R * F * itemsize + 2 * F * 4),
    )
    compiler_params = pltpu.CompilerParams(
        dimension_semantics=("parallel",),
        vmem_limit_bytes=vmem_limit,
    )

    if use_packed:
        Rp, Fp = R // k, k * F  # Fp == 128
        x2p = x2.reshape(Rp, Fp)  # free: contiguous row-major reshape in HBM
        gamma_p = jnp.tile(gamma.astype(jnp.float32).reshape(1, F), (1, k))
        beta_p = jnp.tile(beta.astype(jnp.float32).reshape(1, F), (1, k))
        lane = jnp.arange(Fp)
        seg = (lane[:, None] // F == lane[None, :] // F).astype(jnp.float32)

        tr = tile_rows if tile_rows is not None else _choose_tile_rows(
            Rp, Fp, x2p.dtype, vmem_cap)
        grid = (pl.cdiv(Rp, tr),)
        kernel = functools.partial(_layernorm_packed_kernel, eps=eps,
                                   n_features=F)
        out = pl.pallas_call(
            kernel,
            out_shape=jax.ShapeDtypeStruct((Rp, Fp), x.dtype),
            grid_spec=pltpu.PrefetchScalarGridSpec(
                num_scalar_prefetch=0,
                grid=grid,
                in_specs=[
                    pl.BlockSpec((tr, Fp), lambda i: (i, 0)),
                    pl.BlockSpec((1, Fp), lambda i: (0, 0)),
                    pl.BlockSpec((1, Fp), lambda i: (0, 0)),
                    pl.BlockSpec((Fp, Fp), lambda i: (0, 0)),
                ],
                out_specs=pl.BlockSpec((tr, Fp), lambda i: (i, 0)),
            ),
            compiler_params=compiler_params,
            cost_estimate=cost,
        )(x2p, gamma_p, beta_p, seg)
        return out.reshape(orig_shape)

    # Plain path (F >= 128, 128 % F != 0, or row count not divisible by k).
    gamma2 = gamma.reshape(1, F).astype(jnp.float32)
    beta2 = beta.reshape(1, F).astype(jnp.float32)
    tr = tile_rows if tile_rows is not None else _choose_tile_rows(
        R, F, x2.dtype, vmem_cap)
    grid = (pl.cdiv(R, tr),)
    kernel = functools.partial(_layernorm_kernel, eps=eps, n_features=F)
    out = pl.pallas_call(
        kernel,
        out_shape=jax.ShapeDtypeStruct((R, F), x.dtype),
        grid_spec=pltpu.PrefetchScalarGridSpec(
            num_scalar_prefetch=0,
            grid=grid,
            in_specs=[
                pl.BlockSpec((tr, F), lambda i: (i, 0)),
                pl.BlockSpec((1, F), lambda i: (0, 0)),
                pl.BlockSpec((1, F), lambda i: (0, 0)),
            ],
            out_specs=pl.BlockSpec((tr, F), lambda i: (i, 0)),
        ),
        compiler_params=compiler_params,
        cost_estimate=cost,
    )(x2, gamma2, beta2)
    return out.reshape(orig_shape)


if __name__ == "__main__":
    key = jax.random.PRNGKey(0)
    batch, seq, hidden = 2, 8, 32  # features = hidden = 32 (packed path, k=4)

    x = jax.random.normal(key, (batch, seq, hidden), dtype=jnp.float32)

    # Parameters per the module's __init__: gamma = ones, beta = zeros.
    gamma = jnp.ones((hidden,), dtype=jnp.float32)
    beta = jnp.zeros((hidden,), dtype=jnp.float32)
    eps = 1e-6

    out = layer_norm(x, gamma, beta, eps)
    out = jax.block_until_ready(out)

    # Pure-JAX reference (torch semantics: unbiased std, eps added to std).
    mean = jnp.mean(x, axis=-1, keepdims=True)
    std = jnp.sqrt(jnp.sum((x - mean) ** 2, axis=-1, keepdims=True) / (hidden - 1))
    ref = gamma * (x - mean) / (std + eps) + beta

    assert out.shape == x.shape and out.dtype == x.dtype
    assert jnp.allclose(out, ref, atol=1e-5, rtol=1e-5)
    print("KERNEL_OK")
</pallas_src>

<mosaic_0001>
module attributes {stable_mosaic.version = 11 : i64} {
  func.func @_layernorm_packed_kernel(%arg0: i32, %arg1: memref<4x128xf32, #tpu.memory_space<vmem>>, %arg2: memref<1x128xf32, #tpu.memory_space<vmem>>, %arg3: memref<1x128xf32, #tpu.memory_space<vmem>>, %arg4: memref<128x128xf32, #tpu.memory_space<vmem>>, %arg5: memref<4x128xf32, #tpu.memory_space<vmem>>) attributes {dimension_semantics = [#tpu.dimension_semantics<parallel>], iteration_bounds = array<i64: 1>, scalar_prefetch = 0 : i64, scratch_operands = 0 : i64, tpu.core_type = #tpu.core_type<tc>, window_params = [{transform_indices = @transform_0, window_bounds = array<i64: 4, 128>}, {pipeline_mode = #tpu.pipeline_mode<synchronous>, transform_indices = @transform_1, window_bounds = array<i64: 1, 128>}, {pipeline_mode = #tpu.pipeline_mode<synchronous>, transform_indices = @transform_2, window_bounds = array<i64: 1, 128>}, {pipeline_mode = #tpu.pipeline_mode<synchronous>, transform_indices = @transform_3, window_bounds = array<i64: 128, 128>}, {transform_indices = @transform_4, window_bounds = array<i64: 4, 128>}]} {
    %c0 = arith.constant 0 : index
    %c0_0 = arith.constant 0 : index
    %0 = vector.load %arg1[%c0, %c0_0] : memref<4x128xf32, #tpu.memory_space<vmem>>, vector<4x128xf32>
    %c0_1 = arith.constant 0 : index
    %c0_2 = arith.constant 0 : index
    %1 = vector.load %arg4[%c0_1, %c0_2] : memref<128x128xf32, #tpu.memory_space<vmem>>, vector<128x128xf32>
    %cst = arith.constant dense<0.000000e+00> : vector<4x128xf32>
    %2 = tpu.matmul %0, %1, %cst {dimension_numbers = #tpu.dot_dimension_numbers<[1], [0], [0], [1], [0, 0, 1, 1], [], []>, precision = #tpu.contract_precision<fp32>} : vector<4x128xf32>, vector<128x128xf32>, vector<4x128xf32> -> vector<4x128xf32>
    %cst_3 = arith.constant 3.125000e-02 : f32
    %3 = vector.broadcast %cst_3 : f32 to vector<4x128xf32>
    %4 = arith.mulf %2, %3 : vector<4x128xf32>
    %5 = arith.subf %0, %4 : vector<4x128xf32>
    %6 = arith.mulf %5, %5 : vector<4x128xf32>
    %cst_4 = arith.constant dense<0.000000e+00> : vector<4x128xf32>
    %7 = tpu.matmul %6, %1, %cst_4 {dimension_numbers = #tpu.dot_dimension_numbers<[1], [0], [0], [1], [0, 0, 1, 1], [], []>, precision = #tpu.contract_precision<fp32>} : vector<4x128xf32>, vector<128x128xf32>, vector<4x128xf32> -> vector<4x128xf32>
    %cst_5 = arith.constant 0.0322580636 : f32
    %8 = vector.broadcast %cst_5 : f32 to vector<4x128xf32>
    %9 = arith.mulf %7, %8 : vector<4x128xf32>
    %10 = math.sqrt %9 : vector<4x128xf32>
    %cst_6 = arith.constant 9.99999997E-7 : f32
    %11 = vector.broadcast %cst_6 : f32 to vector<4x128xf32>
    %12 = arith.addf %10, %11 : vector<4x128xf32>
    %13 = tpu.reciprocal %12 : vector<4x128xf32> -> vector<4x128xf32>
    %c0_7 = arith.constant 0 : index
    %c0_8 = arith.constant 0 : index
    %14 = vector.load %arg2[%c0_7, %c0_8] : memref<1x128xf32, #tpu.memory_space<vmem>>, vector<1x128xf32>
    %15 = arith.mulf %5, %13 : vector<4x128xf32>
    %16 = vector.broadcast %14 : vector<1x128xf32> to vector<4x128xf32>
    %17 = arith.mulf %16, %15 : vector<4x128xf32>
    %c0_9 = arith.constant 0 : index
    %c0_10 = arith.constant 0 : index
    %18 = vector.load %arg3[%c0_9, %c0_10] : memref<1x128xf32, #tpu.memory_space<vmem>>, vector<1x128xf32>
    %19 = vector.broadcast %18 : vector<1x128xf32> to vector<4x128xf32>
    %20 = arith.addf %17, %19 : vector<4x128xf32>
    %c0_11 = arith.constant 0 : index
    %c0_12 = arith.constant 0 : index
    %21 = vector.load %arg5[%c0_11, %c0_12] : memref<4x128xf32, #tpu.memory_space<vmem>>, vector<4x128xf32>
    tpu.vector_store %arg5[%c0_11, %c0_12], %20 {strides = array<i32>} : memref<4x128xf32, #tpu.memory_space<vmem>>, vector<4x128xf32>,
    return
  }
  func.func @transform_0(%arg0: i32) -> (i32, i32) {
    %c0_i32 = arith.constant 0 : i32
    %c0_i32_0 = arith.constant 0 : i32
    return %arg0, %c0_i32 : i32, i32
  }
  func.func @transform_1(%arg0: i32) -> (i32, i32) {
    %c0_i32 = arith.constant 0 : i32
    %c0_i32_0 = arith.constant 0 : i32
    %c0_i32_1 = arith.constant 0 : i32
    return %c0_i32, %c0_i32_0 : i32, i32
  }
  func.func @transform_2(%arg0: i32) -> (i32, i32) {
    %c0_i32 = arith.constant 0 : i32
    %c0_i32_0 = arith.constant 0 : i32
    %c0_i32_1 = arith.constant 0 : i32
    return %c0_i32, %c0_i32_0 : i32, i32
  }
  func.func @transform_3(%arg0: i32) -> (i32, i32) {
    %c0_i32 = arith.constant 0 : i32
    %c0_i32_0 = arith.constant 0 : i32
    %c0_i32_1 = arith.constant 0 : i32
    return %c0_i32, %c0_i32_0 : i32, i32
  }
  func.func @transform_4(%arg0: i32) -> (i32, i32) {
    %c0_i32 = arith.constant 0 : i32
    %c0_i32_0 = arith.constant 0 : i32
    return %arg0, %c0_i32 : i32, i32
  }
}

</mosaic_0001>

<llo_original>
// kernel: tpu_custom_call.1
$region0: #{tpu_custom_call.1}
  #allocation0 [shape = 'u32[]', space=smem, size = 0x4, offset = 0x4, fixed_abs, tag = 'smem constant byte address 0x4 - core index']
  #allocation1 [shape = 'u32[72,128]{1,0:T(1,128)}', space=vmem, size = 0x9000, scoped, tag = 'internal scratch']
  %s0 = inlined_call_operand.hbm [shape: f32[4,128], index: 0, kind: input, shape index: {}]
  %s1 = inlined_call_operand.hbm [shape: f32[1,128], index: 1, kind: input, shape index: {}]
  %s2 = inlined_call_operand.vmem [shape: f32[1,128], index: 2, kind: input, shape index: {}]
  %s3 = inlined_call_operand.hbm [shape: f32[128,128], index: 3, kind: input, shape index: {}]
  %s4 = inlined_call_operand.hbm [shape: f32[4,128], index: 4, kind: output, shape index: {}]
  %s5 = sld [smem:[#allocation0]]
  $region38: #{tpu_custom_call.1} parent=0
    _
  %s7 = ssub.s32 1, %s5
  %s8 = scalar_select 0, %s7, %s5
  $region1: #{tpu_custom_call.1} parent=0
    #allocation2 [shape = 'u8[2048]{0}', space=vmem, size = 0x800, scoped, tag = 'input window, operand 0, single buffered']
    #allocation3 [shape = 's32[1]{0}', space=sflag, size = 0x4, scoped, tag = 'scoped memory for tpu_custom_call.1']
    #allocation4 [shape = 's32[1]{0}', space=sflag, size = 0x4, scoped, tag = 'scoped memory for tpu_custom_call.1']
    #allocation5 [shape = 'u8[512]{0}', space=vmem, size = 0x400, scoped, tag = 'input window, operand 1, single buffered']
    #allocation6 [shape = 's32[1]{0}', space=sflag, size = 0x4, scoped, tag = 'scoped memory for tpu_custom_call.1']
    #allocation7 [shape = 'u8[65536]{0}', space=vmem, size = 0x10000, scoped, tag = 'input window, operand 3, single buffered']
    #allocation8 [shape = 'u8[2048]{0}', space=vmem, size = 0x800, scoped, tag = 'output window, operand 0, single buffered']
    %9 = vsyncpa [#allocation3], 0
    %10 = vsyncpa [#allocation6], 0
    %11 = vsyncpa [#allocation4], 0
    // Predicated region
    $region2: #{tpu_custom_call.1} parent=1 // pred_check
      _
    $region3: #{tpu_custom_call.1} parent=1 // pred_check_branch
      %13 = sbr.rel (0) target = $region5
    $region4: #{tpu_custom_call.1} parent=1 // pred_region
      %15 = vsyncadd [#allocation3], 0
      %s17 = sshll.u32 %s0, 4
      %s18 = int_to_ptr.hbm [resolvable:$true] %s17
      %s19 = sshll.u32 [#allocation2], 4
      %s20 = int_to_ptr.vmem [resolvable:$true] %s19
      %22 = dma.hbm_to_vmem [thread:$0]  %s18, 64, %s20, [#allocation3]
    $region5: #{tpu_custom_call.1} parent=1 // pred_fallthru
      _
    // Predicated region
    $region6: #{tpu_custom_call.1} parent=1 // pred_check
      _
    $region7: #{tpu_custom_call.1} parent=1 // pred_check_branch
      %24 = sbr.rel (0) target = $region9
    $region8: #{tpu_custom_call.1} parent=1 // pred_region
      %26 = vsyncadd [#allocation6], 0
      %s28 = sshll.u32 %s1, 4
      %s29 = int_to_ptr.hbm [resolvable:$true] %s28
      %s30 = sshll.u32 [#allocation5], 4
      %s31 = int_to_ptr.vmem [resolvable:$true] %s30
      %33 = dma.hbm_to_vmem [thread:$0]  %s29, 16, %s31, [#allocation6]
    $region9: #{tpu_custom_call.1} parent=1 // pred_fallthru
      _
    // Predicated region
    $region10: #{tpu_custom_call.1} parent=1 // pred_check
      _
    $region11: #{tpu_custom_call.1} parent=1 // pred_check_branch
      %35 = sbr.rel (0) target = $region13
    $region12: #{tpu_custom_call.1} parent=1 // pred_region
      _
    $region13: #{tpu_custom_call.1} parent=1 // pred_fallthru
      _
    // Predicated region
    $region14: #{tpu_custom_call.1} parent=1 // pred_check
      _
    $region15: #{tpu_custom_call.1} parent=1 // pred_check_branch
      %37 = sbr.rel (0) target = $region17
    $region16: #{tpu_custom_call.1} parent=1 // pred_region
      %39 = vsyncadd [#allocation6], 0
      %s40 = sshll.u32 %s3, 4
      %s41 = int_to_ptr.hbm [resolvable:$true] %s40
      %s42 = sshll.u32 [#allocation7], 4
      %s43 = int_to_ptr.vmem [resolvable:$true] %s42
      %48 = dma.hbm_to_vmem [thread:$0]  %s41, 2048, %s43, [#allocation6], 128, 128, 8
    $region17: #{tpu_custom_call.1} parent=1 // pred_fallthru
      _
    // Predicated region
    $region18: #{tpu_custom_call.1} parent=1 // pred_check
      _
    $region19: #{tpu_custom_call.1} parent=1 // pred_check_branch
      %50 = sbr.rel (0) target = $region21
    $region20: #{tpu_custom_call.1} parent=1 // pred_region
      %52 = dma.done [#allocation3], 64
    $region21: #{tpu_custom_call.1} parent=1 // pred_fallthru
      _
    // Predicated region
    $region22: #{tpu_custom_call.1} parent=1 // pred_check
      _
    $region23: #{tpu_custom_call.1} parent=1 // pred_check_branch
      %54 = sbr.rel (0) target = $region25
    $region24: #{tpu_custom_call.1} parent=1 // pred_region
      %56 = dma.done [#allocation6], 16
    $region25: #{tpu_custom_call.1} parent=1 // pred_fallthru
      _
    // Predicated region
    $region26: #{tpu_custom_call.1} parent=1 // pred_check
      _
    $region27: #{tpu_custom_call.1} parent=1 // pred_check_branch
      %58 = sbr.rel (0) target = $region29
    $region28: #{tpu_custom_call.1} parent=1 // pred_region
      %60 = dma.done [#allocation6], 2048
    $region29: #{tpu_custom_call.1} parent=1 // pred_fallthru
      _
    %v61 = vld [vmem:[#allocation2] sm:$0xf]
    %v62 = vld [vmem:[#allocation7] sm:$0xff]
    %v63 = vld [vmem:[#allocation7 + $0x8] sm:$0xff]
    %v64 = vld [vmem:[#allocation7 + $0x10] sm:$0xff]
    %v65 = vld [vmem:[#allocation7 + $0x18] sm:$0xff]
    %v66 = vld [vmem:[#allocation7 + $0x20] sm:$0xff]
    %v67 = vld [vmem:[#allocation7 + $0x28] sm:$0xff]
    %v68 = vld [vmem:[#allocation7 + $0x30] sm:$0xff]
    %v69 = vld [vmem:[#allocation7 + $0x38] sm:$0xff]
    %v70 = vld [vmem:[#allocation7 + $0x40] sm:$0xff]
    %v71 = vld [vmem:[#allocation7 + $0x48] sm:$0xff]
    %v72 = vld [vmem:[#allocation7 + $0x50] sm:$0xff]
    %v73 = vld [vmem:[#allocation7 + $0x58] sm:$0xff]
    %v74 = vld [vmem:[#allocation7 + $0x60] sm:$0xff]
    %v75 = vld [vmem:[#allocation7 + $0x68] sm:$0xff]
    %v76 = vld [vmem:[#allocation7 + $0x70] sm:$0xff]
    %v77 = vld [vmem:[#allocation7 + $0x78] sm:$0xff]
    %v78 = vand.u32 %v77, 4294901760
    %79 = vmatpush.msra.mxu0 %v78
    %v80 = vand.u32 %v76, 4294901760
    %81 = vmatpush.msra.mxu0 %v80
    %v82 = vand.u32 %v75, 4294901760
    %83 = vmatpush.msra.mxu0 %v82
    %v84 = vand.u32 %v74, 4294901760
    %85 = vmatpush.msra.mxu0 %v84
    %v86 = vand.u32 %v73, 4294901760
    %87 = vmatpush.msra.mxu0 %v86
    %v88 = vand.u32 %v72, 4294901760
    %89 = vmatpush.msra.mxu0 %v88
    %v90 = vand.u32 %v71, 4294901760
    %91 = vmatpush.msra.mxu0 %v90
    %v92 = vand.u32 %v70, 4294901760
    %93 = vmatpush.msra.mxu0 %v92
    %v94 = vand.u32 %v69, 4294901760
    %95 = vmatpush.msra.mxu0 %v94
    %v96 = vand.u32 %v68, 4294901760
    %97 = vmatpush.msra.mxu0 %v96
    %v98 = vand.u32 %v67, 4294901760
    %99 = vmatpush.msra.mxu0 %v98
    %v100 = vand.u32 %v66, 4294901760
    %101 = vmatpush.msra.mxu0 %v100
    %v102 = vand.u32 %v65, 4294901760
    %103 = vmatpush.msra.mxu0 %v102
    %v104 = vand.u32 %v64, 4294901760
    %105 = vmatpush.msra.mxu0 %v104
    %v106 = vand.u32 %v63, 4294901760
    %107 = vmatpush.msra.mxu0 %v106
    %v108 = vand.u32 %v62, 4294901760
    %109 = vmatpush.msra.mxu0 %v108
    %v110 = vand.u32 %v61, 4294901760
    %v111 = vsub.f32 %v61, %v110
    %v112 = vand.u32 %v111, 4294901760
    %v113 = vsub.f32 %v111, %v112
    %v114 = vand.u32 %v113, 4294901760
    %115 = vmatmul.f32.gmra.mxu0 %v114
    %v116 = vpop.f32.mrf.mxu0
    %v117 = vadd.f32 0.0, %v116
    %118 = vdwg.mxu0
    %v119 = vand.u32 %v77, 4294901760
    %v120 = vsub.f32 %v77, %v119
    %v121 = vand.u32 %v120, 4294901760
    %v122 = vsub.f32 %v120, %v121
    %v123 = vand.u32 %v122, 4294901760
    %124 = vmatpush.msra.mxu0 %v123
    %v125 = vand.u32 %v76, 4294901760
    %v126 = vsub.f32 %v76, %v125
    %v127 = vand.u32 %v126, 4294901760
    %v128 = vsub.f32 %v126, %v127
    %v129 = vand.u32 %v128, 4294901760
    %130 = vmatpush.msra.mxu0 %v129
    %v131 = vand.u32 %v75, 4294901760
    %v132 = vsub.f32 %v75, %v131
    %v133 = vand.u32 %v132, 4294901760
    %v134 = vsub.f32 %v132, %v133
    %v135 = vand.u32 %v134, 4294901760
    %136 = vmatpush.msra.mxu0 %v135
    %v137 = vand.u32 %v74, 4294901760
    %v138 = vsub.f32 %v74, %v137
    %v139 = vand.u32 %v138, 4294901760
    %v140 = vsub.f32 %v138, %v139
    %v141 = vand.u32 %v140, 4294901760
    %142 = vmatpush.msra.mxu0 %v141
    %v143 = vand.u32 %v73, 4294901760
    %v144 = vsub.f32 %v73, %v143
    %v145 = vand.u32 %v144, 4294901760
    %v146 = vsub.f32 %v144, %v145
    %v147 = vand.u32 %v146, 4294901760
    %148 = vmatpush.msra.mxu0 %v147
    %v149 = vand.u32 %v72, 4294901760
    %v150 = vsub.f32 %v72, %v149
    %v151 = vand.u32 %v150, 4294901760
    %v152 = vsub.f32 %v150, %v151
    %v153 = vand.u32 %v152, 4294901760
    %154 = vmatpush.msra.mxu0 %v153
    %v155 = vand.u32 %v71, 4294901760
    %v156 = vsub.f32 %v71, %v155
    %v157 = vand.u32 %v156, 4294901760
    %v158 = vsub.f32 %v156, %v157
    %v159 = vand.u32 %v158, 4294901760
    %160 = vmatpush.msra.mxu0 %v159
    %v161 = vand.u32 %v70, 4294901760
    %v162 = vsub.f32 %v70, %v161
    %v163 = vand.u32 %v162, 4294901760
    %v164 = vsub.f32 %v162, %v163
    %v165 = vand.u32 %v164, 4294901760
    %166 = vmatpush.msra.mxu0 %v165
    %v167 = vand.u32 %v69, 4294901760
    %v168 = vsub.f32 %v69, %v167
    %v169 = vand.u32 %v168, 4294901760
    %v170 = vsub.f32 %v168, %v169
    %v171 = vand.u32 %v170, 4294901760
    %172 = vmatpush.msra.mxu0 %v171
    %v173 = vand.u32 %v68, 4294901760
    %v174 = vsub.f32 %v68, %v173
    %v175 = vand.u32 %v174, 4294901760
    %v176 = vsub.f32 %v174, %v175
    %v177 = vand.u32 %v176, 4294901760
    %178 = vmatpush.msra.mxu0 %v177
    %v179 = vand.u32 %v67, 4294901760
    %v180 = vsub.f32 %v67, %v179
    %v181 = vand.u32 %v180, 4294901760
    %v182 = vsub.f32 %v180, %v181
    %v183 = vand.u32 %v182, 4294901760
    %184 = vmatpush.msra.mxu0 %v183
    %v185 = vand.u32 %v66, 4294901760
    %v186 = vsub.f32 %v66, %v185
    %v187 = vand.u32 %v186, 4294901760
    %v188 = vsub.f32 %v186, %v187
    %v189 = vand.u32 %v188, 4294901760
    %190 = vmatpush.msra.mxu0 %v189
    %v191 = vand.u32 %v65, 4294901760
    %v192 = vsub.f32 %v65, %v191
    %v193 = vand.u32 %v192, 4294901760
    %v194 = vsub.f32 %v192, %v193
    %v195 = vand.u32 %v194, 4294901760
    %196 = vmatpush.msra.mxu0 %v195
    %v197 = vand.u32 %v64, 4294901760
    %v198 = vsub.f32 %v64, %v197
    %v199 = vand.u32 %v198, 4294901760
    %v200 = vsub.f32 %v198, %v199
    %v201 = vand.u32 %v200, 4294901760
    %202 = vmatpush.msra.mxu0 %v201
    %v203 = vand.u32 %v63, 4294901760
    %v204 = vsub.f32 %v63, %v203
    %v205 = vand.u32 %v204, 4294901760
    %v206 = vsub.f32 %v204, %v205
    %v207 = vand.u32 %v206, 4294901760
    %208 = vmatpush.msra.mxu0 %v207
    %v209 = vand.u32 %v62, 4294901760
    %v210 = vsub.f32 %v62, %v209
    %v211 = vand.u32 %v210, 4294901760
    %v212 = vsub.f32 %v210, %v211
    %v213 = vand.u32 %v212, 4294901760
    %214 = vmatpush.msra.mxu0 %v213
    %v215 = vand.u32 %v61, 4294901760
    %216 = vmatmul.f32.gmra.mxu0 %v215
    %v217 = vpop.f32.mrf.mxu0
    %v218 = vadd.f32 %v117, %v217
    %219 = vdwg.mxu0
    %v220 = vand.u32 %v77, 4294901760
    %v221 = vsub.f32 %v77, %v220
    %222 = vmatpush.msra.mxu0 %v221
    %v223 = vand.u32 %v76, 4294901760
    %v224 = vsub.f32 %v76, %v223
    %225 = vmatpush.msra.mxu0 %v224
    %v226 = vand.u32 %v75, 4294901760
    %v227 = vsub.f32 %v75, %v226
    %228 = vmatpush.msra.mxu0 %v227
    %v229 = vand.u32 %v74, 4294901760
    %v230 = vsub.f32 %v74, %v229
    %231 = vmatpush.msra.mxu0 %v230
    %v232 = vand.u32 %v73, 4294901760
    %v233 = vsub.f32 %v73, %v232
    %234 = vmatpush.msra.mxu0 %v233
    %v235 = vand.u32 %v72, 4294901760
    %v236 = vsub.f32 %v72, %v235
    %237 = vmatpush.msra.mxu0 %v236
    %v238 = vand.u32 %v71, 4294901760
    %v239 = vsub.f32 %v71, %v238
    %240 = vmatpush.msra.mxu0 %v239
    %v241 = vand.u32 %v70, 4294901760
    %v242 = vsub.f32 %v70, %v241
    %243 = vmatpush.msra.mxu0 %v242
    %v244 = vand.u32 %v69, 4294901760
    %v245 = vsub.f32 %v69, %v244
    %246 = vmatpush.msra.mxu0 %v245
    %v247 = vand.u32 %v68, 4294901760
    %v248 = vsub.f32 %v68, %v247
    %249 = vmatpush.msra.mxu0 %v248
    %v250 = vand.u32 %v67, 4294901760
    %v251 = vsub.f32 %v67, %v250
    %252 = vmatpush.msra.mxu0 %v251
    %v253 = vand.u32 %v66, 4294901760
    %v254 = vsub.f32 %v66, %v253
    %255 = vmatpush.msra.mxu0 %v254
    %v256 = vand.u32 %v65, 4294901760
    %v257 = vsub.f32 %v65, %v256
    %258 = vmatpush.msra.mxu0 %v257
    %v259 = vand.u32 %v64, 4294901760
    %v260 = vsub.f32 %v64, %v259
    %261 = vmatpush.msra.mxu0 %v260
    %v262 = vand.u32 %v63, 4294901760
    %v263 = vsub.f32 %v63, %v262
    %264 = vmatpush.msra.mxu0 %v263
    %v265 = vand.u32 %v62, 4294901760
    %v266 = vsub.f32 %v62, %v265
    %267 = vmatpush.msra.mxu0 %v266
    %v268 = vand.u32 %v61, 4294901760
    %v269 = vsub.f32 %v61, %v268
    %270 = vmatmul.f32.gmra.mxu0 %v269
    %v271 = vpop.f32.mrf.mxu0
    %v272 = vadd.f32 %v218, %v271
    %273 = vdwg.mxu0
    %v274 = vand.u32 %v77, 4294901760
    %275 = vmatpush.msra.mxu0 %v274
    %v276 = vand.u32 %v76, 4294901760
    %277 = vmatpush.msra.mxu0 %v276
    %v278 = vand.u32 %v75, 4294901760
    %279 = vmatpush.msra.mxu0 %v278
    %v280 = vand.u32 %v74, 4294901760
    %281 = vmatpush.msra.mxu0 %v280
    %v282 = vand.u32 %v73, 4294901760
    %283 = vmatpush.msra.mxu0 %v282
    %v284 = vand.u32 %v72, 4294901760
    %285 = vmatpush.msra.mxu0 %v284
    %v286 = vand.u32 %v71, 4294901760
    %287 = vmatpush.msra.mxu0 %v286
    %v288 = vand.u32 %v70, 4294901760
    %289 = vmatpush.msra.mxu0 %v288
    %v290 = vand.u32 %v69, 4294901760
    %291 = vmatpush.msra.mxu0 %v290
    %v292 = vand.u32 %v68, 4294901760
    %293 = vmatpush.msra.mxu0 %v292
    %v294 = vand.u32 %v67, 4294901760
    %295 = vmatpush.msra.mxu0 %v294
    %v296 = vand.u32 %v66, 4294901760
    %297 = vmatpush.msra.mxu0 %v296
    %v298 = vand.u32 %v65, 4294901760
    %299 = vmatpush.msra.mxu0 %v298
    %v300 = vand.u32 %v64, 4294901760
    %301 = vmatpush.msra.mxu0 %v300
    %v302 = vand.u32 %v63, 4294901760
    %303 = vmatpush.msra.mxu0 %v302
    %v304 = vand.u32 %v62, 4294901760
    %305 = vmatpush.msra.mxu0 %v304
    %v306 = vand.u32 %v61, 4294901760
    %v307 = vsub.f32 %v61, %v306
    %v308 = vand.u32 %v307, 4294901760
    %309 = vmatmul.f32.gmra.mxu0 %v308
    %v310 = vpop.f32.mrf.mxu0
    %v311 = vadd.f32 %v272, %v310
    %312 = vdwg.mxu0
    %v313 = vand.u32 %v77, 4294901760
    %v314 = vsub.f32 %v77, %v313
    %v315 = vand.u32 %v314, 4294901760
    %316 = vmatpush.msra.mxu0 %v315
    %v317 = vand.u32 %v76, 4294901760
    %v318 = vsub.f32 %v76, %v317
    %v319 = vand.u32 %v318, 4294901760
    %320 = vmatpush.msra.mxu0 %v319
    %v321 = vand.u32 %v75, 4294901760
    %v322 = vsub.f32 %v75, %v321
    %v323 = vand.u32 %v322, 4294901760
    %324 = vmatpush.msra.mxu0 %v323
    %v325 = vand.u32 %v74, 4294901760
    %v326 = vsub.f32 %v74, %v325
    %v327 = vand.u32 %v326, 4294901760
    %328 = vmatpush.msra.mxu0 %v327
    %v329 = vand.u32 %v73, 4294901760
    %v330 = vsub.f32 %v73, %v329
    %v331 = vand.u32 %v330, 4294901760
    %332 = vmatpush.msra.mxu0 %v331
    %v333 = vand.u32 %v72, 4294901760
    %v334 = vsub.f32 %v72, %v333
    %v335 = vand.u32 %v334, 4294901760
    %336 = vmatpush.msra.mxu0 %v335
    %v337 = vand.u32 %v71, 4294901760
    %v338 = vsub.f32 %v71, %v337
    %v339 = vand.u32 %v338, 4294901760
    %340 = vmatpush.msra.mxu0 %v339
    %v341 = vand.u32 %v70, 4294901760
    %v342 = vsub.f32 %v70, %v341
    %v343 = vand.u32 %v342, 4294901760
    %344 = vmatpush.msra.mxu0 %v343
    %v345 = vand.u32 %v69, 4294901760
    %v346 = vsub.f32 %v69, %v345
    %v347 = vand.u32 %v346, 4294901760
    %348 = vmatpush.msra.mxu0 %v347
    %v349 = vand.u32 %v68, 4294901760
    %v350 = vsub.f32 %v68, %v349
    %v351 = vand.u32 %v350, 4294901760
    %352 = vmatpush.msra.mxu0 %v351
    %v353 = vand.u32 %v67, 4294901760
    %v354 = vsub.f32 %v67, %v353
    %v355 = vand.u32 %v354, 4294901760
    %356 = vmatpush.msra.mxu0 %v355
    %v357 = vand.u32 %v66, 4294901760
    %v358 = vsub.f32 %v66, %v357
    %v359 = vand.u32 %v358, 4294901760
    %360 = vmatpush.msra.mxu0 %v359
    %v361 = vand.u32 %v65, 4294901760
    %v362 = vsub.f32 %v65, %v361
    %v363 = vand.u32 %v362, 4294901760
    %364 = vmatpush.msra.mxu0 %v363
    %v365 = vand.u32 %v64, 4294901760
    %v366 = vsub.f32 %v64, %v365
    %v367 = vand.u32 %v366, 4294901760
    %368 = vmatpush.msra.mxu0 %v367
    %v369 = vand.u32 %v63, 4294901760
    %v370 = vsub.f32 %v63, %v369
    %v371 = vand.u32 %v370, 4294901760
    %372 = vmatpush.msra.mxu0 %v371
    %v373 = vand.u32 %v62, 4294901760
    %v374 = vsub.f32 %v62, %v373
    %v375 = vand.u32 %v374, 4294901760
    %376 = vmatpush.msra.mxu0 %v375
    %v377 = vand.u32 %v61, 4294901760
    %378 = vmatmul.f32.gmra.mxu0 %v377
    %v379 = vpop.f32.mrf.mxu0
    %v380 = vadd.f32 %v311, %v379
    %381 = vdwg.mxu0
    %v382 = vand.u32 %v77, 4294901760
    %383 = vmatpush.msra.mxu0 %v382
    %v384 = vand.u32 %v76, 4294901760
    %385 = vmatpush.msra.mxu0 %v384
    %v386 = vand.u32 %v75, 4294901760
    %387 = vmatpush.msra.mxu0 %v386
    %v388 = vand.u32 %v74, 4294901760
    %389 = vmatpush.msra.mxu0 %v388
    %v390 = vand.u32 %v73, 4294901760
    %391 = vmatpush.msra.mxu0 %v390
    %v392 = vand.u32 %v72, 4294901760
    %393 = vmatpush.msra.mxu0 %v392
    %v394 = vand.u32 %v71, 4294901760
    %395 = vmatpush.msra.mxu0 %v394
    %v396 = vand.u32 %v70, 4294901760
    %397 = vmatpush.msra.mxu0 %v396
    %v398 = vand.u32 %v69, 4294901760
    %399 = vmatpush.msra.mxu0 %v398
    %v400 = vand.u32 %v68, 4294901760
    %401 = vmatpush.msra.mxu0 %v400
    %v402 = vand.u32 %v67, 4294901760
    %403 = vmatpush.msra.mxu0 %v402
    %v404 = vand.u32 %v66, 4294901760
    %405 = vmatpush.msra.mxu0 %v404
    %v406 = vand.u32 %v65, 4294901760
    %407 = vmatpush.msra.mxu0 %v406
    %v408 = vand.u32 %v64, 4294901760
    %409 = vmatpush.msra.mxu0 %v408
    %v410 = vand.u32 %v63, 4294901760
    %411 = vmatpush.msra.mxu0 %v410
    %v412 = vand.u32 %v62, 4294901760
    %413 = vmatpush.msra.mxu0 %v412
    %v414 = vand.u32 %v61, 4294901760
    %415 = vmatmul.f32.gmra.mxu0 %v414
    %v416 = vpop.f32.mrf.mxu0
    %v417 = vadd.f32 %v380, %v416
    %418 = vdwg.mxu0
    %v419 = vmul.f32 %v417, 0.03125
    %v420 = vsub.f32 %v61, %v419
    %v421 = vmul.f32 %v420, %v420
    %v422 = vand.u32 %v77, 4294901760
    %423 = vmatpush.msra.mxu0 %v422
    %v424 = vand.u32 %v76, 4294901760
    %425 = vmatpush.msra.mxu0 %v424
    %v426 = vand.u32 %v75, 4294901760
    %427 = vmatpush.msra.mxu0 %v426
    %v428 = vand.u32 %v74, 4294901760
    %429 = vmatpush.msra.mxu0 %v428
    %v430 = vand.u32 %v73, 4294901760
    %431 = vmatpush.msra.mxu0 %v430
    %v432 = vand.u32 %v72, 4294901760
    %433 = vmatpush.msra.mxu0 %v432
    %v434 = vand.u32 %v71, 4294901760
    %435 = vmatpush.msra.mxu0 %v434
    %v436 = vand.u32 %v70, 4294901760
    %437 = vmatpush.msra.mxu0 %v436
    %v438 = vand.u32 %v69, 4294901760
    %439 = vmatpush.msra.mxu0 %v438
    %v440 = vand.u32 %v68, 4294901760
    %441 = vmatpush.msra.mxu0 %v440
    %v442 = vand.u32 %v67, 4294901760
    %443 = vmatpush.msra.mxu0 %v442
    %v444 = vand.u32 %v66, 4294901760
    %445 = vmatpush.msra.mxu0 %v444
    %v446 = vand.u32 %v65, 4294901760
    %447 = vmatpush.msra.mxu0 %v446
    %v448 = vand.u32 %v64, 4294901760
    %449 = vmatpush.msra.mxu0 %v448
    %v450 = vand.u32 %v63, 4294901760
    %451 = vmatpush.msra.mxu0 %v450
    %v452 = vand.u32 %v62, 4294901760
    %453 = vmatpush.msra.mxu0 %v452
    %v454 = vand.u32 %v421, 4294901760
    %v455 = vsub.f32 %v421, %v454
    %v456 = vand.u32 %v455, 4294901760
    %v457 = vsub.f32 %v455, %v456
    %v458 = vand.u32 %v457, 4294901760
    %459 = vmatmul.f32.gmra.mxu0 %v458
    %v460 = vpop.f32.mrf.mxu0
    %v461 = vadd.f32 0.0, %v460
    %462 = vdwg.mxu0
    %v463 = vand.u32 %v77, 4294901760
    %v464 = vsub.f32 %v77, %v463
    %v465 = vand.u32 %v464, 4294901760
    %v466 = vsub.f32 %v464, %v465
    %v467 = vand.u32 %v466, 4294901760
    %468 = vmatpush.msra.mxu0 %v467
    %v469 = vand.u32 %v76, 4294901760
    %v470 = vsub.f32 %v76, %v469
    %v471 = vand.u32 %v470, 4294901760
    %v472 = vsub.f32 %v470, %v471
    %v473 = vand.u32 %v472, 4294901760
    %474 = vmatpush.msra.mxu0 %v473
    %v475 = vand.u32 %v75, 4294901760
    %v476 = vsub.f32 %v75, %v475
    %v477 = vand.u32 %v476, 4294901760
    %v478 = vsub.f32 %v476, %v477
    %v479 = vand.u32 %v478, 4294901760
    %480 = vmatpush.msra.mxu0 %v479
    %v481 = vand.u32 %v74, 4294901760
    %v482 = vsub.f32 %v74, %v481
    %v483 = vand.u32 %v482, 4294901760
    %v484 = vsub.f32 %v482, %v483
    %v485 = vand.u32 %v484, 4294901760
    %486 = vmatpush.msra.mxu0 %v485
    %v487 = vand.u32 %v73, 4294901760
    %v488 = vsub.f32 %v73, %v487
    %v489 = vand.u32 %v488, 4294901760
    %v490 = vsub.f32 %v488, %v489
    %v491 = vand.u32 %v490, 4294901760
    %492 = vmatpush.msra.mxu0 %v491
    %v493 = vand.u32 %v72, 4294901760
    %v494 = vsub.f32 %v72, %v493
    %v495 = vand.u32 %v494, 4294901760
    %v496 = vsub.f32 %v494, %v495
    %v497 = vand.u32 %v496, 4294901760
    %498 = vmatpush.msra.mxu0 %v497
    %v499 = vand.u32 %v71, 4294901760
    %v500 = vsub.f32 %v71, %v499
    %v501 = vand.u32 %v500, 4294901760
    %v502 = vsub.f32 %v500, %v501
    %v503 = vand.u32 %v502, 4294901760
    %504 = vmatpush.msra.mxu0 %v503
    %v505 = vand.u32 %v70, 4294901760
    %v506 = vsub.f32 %v70, %v505
    %v507 = vand.u32 %v506, 4294901760
    %v508 = vsub.f32 %v506, %v507
    %v509 = vand.u32 %v508, 4294901760
    %510 = vmatpush.msra.mxu0 %v509
    %v511 = vand.u32 %v69, 4294901760
    %v512 = vsub.f32 %v69, %v511
    %v513 = vand.u32 %v512, 4294901760
    %v514 = vsub.f32 %v512, %v513
    %v515 = vand.u32 %v514, 4294901760
    %516 = vmatpush.msra.mxu0 %v515
    %v517 = vand.u32 %v68, 4294901760
    %v518 = vsub.f32 %v68, %v517
    %v519 = vand.u32 %v518, 4294901760
    %v520 = vsub.f32 %v518, %v519
    %v521 = vand.u32 %v520, 4294901760
    %522 = vmatpush.msra.mxu0 %v521
    %v523 = vand.u32 %v67, 4294901760
    %v524 = vsub.f32 %v67, %v523
    %v525 = vand.u32 %v524, 4294901760
    %v526 = vsub.f32 %v524, %v525
    %v527 = vand.u32 %v526, 4294901760
    %528 = vmatpush.msra.mxu0 %v527
    %v529 = vand.u32 %v66, 4294901760
    %v530 = vsub.f32 %v66, %v529
    %v531 = vand.u32 %v530, 4294901760
    %v532 = vsub.f32 %v530, %v531
    %v533 = vand.u32 %v532, 4294901760
    %534 = vmatpush.msra.mxu0 %v533
    %v535 = vand.u32 %v65, 4294901760
    %v536 = vsub.f32 %v65, %v535
    %v537 = vand.u32 %v536, 4294901760
    %v538 = vsub.f32 %v536, %v537
    %v539 = vand.u32 %v538, 4294901760
    %540 = vmatpush.msra.mxu0 %v539
    %v541 = vand.u32 %v64, 4294901760
    %v542 = vsub.f32 %v64, %v541
    %v543 = vand.u32 %v542, 4294901760
    %v544 = vsub.f32 %v542, %v543
    %v545 = vand.u32 %v544, 4294901760
    %546 = vmatpush.msra.mxu0 %v545
    %v547 = vand.u32 %v63, 4294901760
    %v548 = vsub.f32 %v63, %v547
    %v549 = vand.u32 %v548, 4294901760
    %v550 = vsub.f32 %v548, %v549
    %v551 = vand.u32 %v550, 4294901760
    %552 = vmatpush.msra.mxu0 %v551
    %v553 = vand.u32 %v62, 4294901760
    %v554 = vsub.f32 %v62, %v553
    %v555 = vand.u32 %v554, 4294901760
    %v556 = vsub.f32 %v554, %v555
    %v557 = vand.u32 %v556, 4294901760
    %558 = vmatpush.msra.mxu0 %v557
    %v559 = vand.u32 %v421, 4294901760
    %560 = vmatmul.f32.gmra.mxu0 %v559
    %v561 = vpop.f32.mrf.mxu0
    %v562 = vadd.f32 %v461, %v561
    %563 = vdwg.mxu0
    %v564 = vand.u32 %v77, 4294901760
    %v565 = vsub.f32 %v77, %v564
    %566 = vmatpush.msra.mxu0 %v565
    %v567 = vand.u32 %v76, 4294901760
    %v568 = vsub.f32 %v76, %v567
    %569 = vmatpush.msra.mxu0 %v568
    %v570 = vand.u32 %v75, 4294901760
    %v571 = vsub.f32 %v75, %v570
    %572 = vmatpush.msra.mxu0 %v571
    %v573 = vand.u32 %v74, 4294901760
    %v574 = vsub.f32 %v74, %v573
    %575 = vmatpush.msra.mxu0 %v574
    %v576 = vand.u32 %v73, 4294901760
    %v577 = vsub.f32 %v73, %v576
    %578 = vmatpush.msra.mxu0 %v577
    %v579 = vand.u32 %v72, 4294901760
    %v580 = vsub.f32 %v72, %v579
    %581 = vmatpush.msra.mxu0 %v580
    %v582 = vand.u32 %v71, 4294901760
    %v583 = vsub.f32 %v71, %v582
    %584 = vmatpush.msra.mxu0 %v583
    %v585 = vand.u32 %v70, 4294901760
    %v586 = vsub.f32 %v70, %v585
    %587 = vmatpush.msra.mxu0 %v586
    %v588 = vand.u32 %v69, 4294901760
    %v589 = vsub.f32 %v69, %v588
    %590 = vmatpush.msra.mxu0 %v589
    %v591 = vand.u32 %v68, 4294901760
    %v592 = vsub.f32 %v68, %v591
    %593 = vmatpush.msra.mxu0 %v592
    %v594 = vand.u32 %v67, 4294901760
    %v595 = vsub.f32 %v67, %v594
    %596 = vmatpush.msra.mxu0 %v595
    %v597 = vand.u32 %v66, 4294901760
    %v598 = vsub.f32 %v66, %v597
    %599 = vmatpush.msra.mxu0 %v598
    %v600 = vand.u32 %v65, 4294901760
    %v601 = vsub.f32 %v65, %v600
    %602 = vmatpush.msra.mxu0 %v601
    %v603 = vand.u32 %v64, 4294901760
    %v604 = vsub.f32 %v64, %v603
    %605 = vmatpush.msra.mxu0 %v604
    %v606 = vand.u32 %v63, 4294901760
    %v607 = vsub.f32 %v63, %v606
    %608 = vmatpush.msra.mxu0 %v607
    %v609 = vand.u32 %v62, 4294901760
    %v610 = vsub.f32 %v62, %v609
    %611 = vmatpush.msra.mxu0 %v610
    %v612 = vand.u32 %v421, 4294901760
    %v613 = vsub.f32 %v421, %v612
    %614 = vmatmul.f32.gmra.mxu0 %v613
    %v615 = vpop.f32.mrf.mxu0
    %v616 = vadd.f32 %v562, %v615
    %617 = vdwg.mxu0
    %v618 = vand.u32 %v77, 4294901760
    %619 = vmatpush.msra.mxu0 %v618
    %v620 = vand.u32 %v76, 4294901760
    %621 = vmatpush.msra.mxu0 %v620
    %v622 = vand.u32 %v75, 4294901760
    %623 = vmatpush.msra.mxu0 %v622
    %v624 = vand.u32 %v74, 4294901760
    %625 = vmatpush.msra.mxu0 %v624
    %v626 = vand.u32 %v73, 4294901760
    %627 = vmatpush.msra.mxu0 %v626
    %v628 = vand.u32 %v72, 4294901760
    %629 = vmatpush.msra.mxu0 %v628
    %v630 = vand.u32 %v71, 4294901760
    %631 = vmatpush.msra.mxu0 %v630
    %v632 = vand.u32 %v70, 4294901760
    %633 = vmatpush.msra.mxu0 %v632
    %v634 = vand.u32 %v69, 4294901760
    %635 = vmatpush.msra.mxu0 %v634
    %v636 = vand.u32 %v68, 4294901760
    %637 = vmatpush.msra.mxu0 %v636
    %v638 = vand.u32 %v67, 4294901760
    %639 = vmatpush.msra.mxu0 %v638
    %v640 = vand.u32 %v66, 4294901760
    %641 = vmatpush.msra.mxu0 %v640
    %v642 = vand.u32 %v65, 4294901760
    %643 = vmatpush.msra.mxu0 %v642
    %v644 = vand.u32 %v64, 4294901760
    %645 = vmatpush.msra.mxu0 %v644
    %v646 = vand.u32 %v63, 4294901760
    %647 = vmatpush.msra.mxu0 %v646
    %v648 = vand.u32 %v62, 4294901760
    %649 = vmatpush.msra.mxu0 %v648
    %v650 = vand.u32 %v421, 4294901760
    %v651 = vsub.f32 %v421, %v650
    %v652 = vand.u32 %v651, 4294901760
    %653 = vmatmul.f32.gmra.mxu0 %v652
    %v654 = vpop.f32.mrf.mxu0
    %v655 = vadd.f32 %v616, %v654
    %656 = vdwg.mxu0
    %v657 = vand.u32 %v77, 4294901760
    %v658 = vsub.f32 %v77, %v657
    %v659 = vand.u32 %v658, 4294901760
    %660 = vmatpush.msra.mxu0 %v659
    %v661 = vand.u32 %v76, 4294901760
    %v662 = vsub.f32 %v76, %v661
    %v663 = vand.u32 %v662, 4294901760
    %664 = vmatpush.msra.mxu0 %v663
    %v665 = vand.u32 %v75, 4294901760
    %v666 = vsub.f32 %v75, %v665
    %v667 = vand.u32 %v666, 4294901760
    %668 = vmatpush.msra.mxu0 %v667
    %v669 = vand.u32 %v74, 4294901760
    %v670 = vsub.f32 %v74, %v669
    %v671 = vand.u32 %v670, 4294901760
    %672 = vmatpush.msra.mxu0 %v671
    %v673 = vand.u32 %v73, 4294901760
    %v674 = vsub.f32 %v73, %v673
    %v675 = vand.u32 %v674, 4294901760
    %676 = vmatpush.msra.mxu0 %v675
    %v677 = vand.u32 %v72, 4294901760
    %v678 = vsub.f32 %v72, %v677
    %v679 = vand.u32 %v678, 4294901760
    %680 = vmatpush.msra.mxu0 %v679
    %v681 = vand.u32 %v71, 4294901760
    %v682 = vsub.f32 %v71, %v681
    %v683 = vand.u32 %v682, 4294901760
    %684 = vmatpush.msra.mxu0 %v683
    %v685 = vand.u32 %v70, 4294901760
    %v686 = vsub.f32 %v70, %v685
    %v687 = vand.u32 %v686, 4294901760
    %688 = vmatpush.msra.mxu0 %v687
    %v689 = vand.u32 %v69, 4294901760
    %v690 = vsub.f32 %v69, %v689
    %v691 = vand.u32 %v690, 4294901760
    %692 = vmatpush.msra.mxu0 %v691
    %v693 = vand.u32 %v68, 4294901760
    %v694 = vsub.f32 %v68, %v693
    %v695 = vand.u32 %v694, 4294901760
    %696 = vmatpush.msra.mxu0 %v695
    %v697 = vand.u32 %v67, 4294901760
    %v698 = vsub.f32 %v67, %v697
    %v699 = vand.u32 %v698, 4294901760
    %700 = vmatpush.msra.mxu0 %v699
    %v701 = vand.u32 %v66, 4294901760
    %v702 = vsub.f32 %v66, %v701
    %v703 = vand.u32 %v702, 4294901760
    %704 = vmatpush.msra.mxu0 %v703
    %v705 = vand.u32 %v65, 4294901760
    %v706 = vsub.f32 %v65, %v705
    %v707 = vand.u32 %v706, 4294901760
    %708 = vmatpush.msra.mxu0 %v707
    %v709 = vand.u32 %v64, 4294901760
    %v710 = vsub.f32 %v64, %v709
    %v711 = vand.u32 %v710, 4294901760
    %712 = vmatpush.msra.mxu0 %v711
    %v713 = vand.u32 %v63, 4294901760
    %v714 = vsub.f32 %v63, %v713
    %v715 = vand.u32 %v714, 4294901760
    %716 = vmatpush.msra.mxu0 %v715
    %v717 = vand.u32 %v62, 4294901760
    %v718 = vsub.f32 %v62, %v717
    %v719 = vand.u32 %v718, 4294901760
    %720 = vmatpush.msra.mxu0 %v719
    %v721 = vand.u32 %v421, 4294901760
    %722 = vmatmul.f32.gmra.mxu0 %v721
    %v723 = vpop.f32.mrf.mxu0
    %v724 = vadd.f32 %v655, %v723
    %725 = vdwg.mxu0
    %v726 = vand.u32 %v77, 4294901760
    %727 = vmatpush.msra.mxu0 %v726
    %v728 = vand.u32 %v76, 4294901760
    %729 = vmatpush.msra.mxu0 %v728
    %v730 = vand.u32 %v75, 4294901760
    %731 = vmatpush.msra.mxu0 %v730
    %v732 = vand.u32 %v74, 4294901760
    %733 = vmatpush.msra.mxu0 %v732
    %v734 = vand.u32 %v73, 4294901760
    %735 = vmatpush.msra.mxu0 %v734
    %v736 = vand.u32 %v72, 4294901760
    %737 = vmatpush.msra.mxu0 %v736
    %v738 = vand.u32 %v71, 4294901760
    %739 = vmatpush.msra.mxu0 %v738
    %v740 = vand.u32 %v70, 4294901760
    %741 = vmatpush.msra.mxu0 %v740
    %v742 = vand.u32 %v69, 4294901760
    %743 = vmatpush.msra.mxu0 %v742
    %v744 = vand.u32 %v68, 4294901760
    %745 = vmatpush.msra.mxu0 %v744
    %v746 = vand.u32 %v67, 4294901760
    %747 = vmatpush.msra.mxu0 %v746
    %v748 = vand.u32 %v66, 4294901760
    %749 = vmatpush.msra.mxu0 %v748
    %v750 = vand.u32 %v65, 4294901760
    %751 = vmatpush.msra.mxu0 %v750
    %v752 = vand.u32 %v64, 4294901760
    %753 = vmatpush.msra.mxu0 %v752
    %v754 = vand.u32 %v63, 4294901760
    %755 = vmatpush.msra.mxu0 %v754
    %v756 = vand.u32 %v62, 4294901760
    %757 = vmatpush.msra.mxu0 %v756
    %v758 = vand.u32 %v421, 4294901760
    %759 = vmatmul.f32.gmra.mxu0 %v758
    %v760 = vpop.f32.mrf.mxu0
    %v761 = vadd.f32 %v724, %v760
    %762 = vdwg.mxu0
    %v763 = vmul.f32 %v761, 0.032258064
    %v764 = vrsqrt.pop %v763
    %v765 = vmul.f32 %v764, %v763
    %v766 = vmul.f32 %v765, %v764
    %v767 = vmul.f32 0.5, %v766
    %v768 = vsub.f32 1.5, %v767
    %v769 = vmul.f32 %v764, %v768
    %v770 = vmul.f32 %v763, %v769
    %vm771 = vcmp.eq.f32.partialorder %v763, inf
    %v772 = vsel %vm771, %v763, %v770
    %vm773 = vcmp.eq.f32.partialorder %v763, 0.0
    %v774 = vand.u32 %v763, 2147483648
    %v775 = vsel %vm773, %v774, %v772
    %v776 = vadd.f32 %v775, 1e-06
    %v777 = vrcp.pop %v776
    %v778 = vmul.f32 %v776, %v777
    %v779 = vsub.f32 1.0, %v778
    %v780 = vmul.f32 %v777, %v779
    %v781 = vadd.f32 %v777, %v780
    %vm782 = vweird.f32 %v776
    %vm783 = vweird.f32 %v777
    %vm784 = vmor %vm782, %vm783
    %v785 = vsel %vm784, %v777, %v781
    %v786 = vand.u32 2147483647, %v776
    %vm787 = vcmp.eq.f32.partialorder %v786, 8.507059e+37
    %v788 = vand.u32 %v776, 2147483648
    %v789 = vor.u32 1.1754944e-38, %v788
    %v790 = vsel %vm787, %v789, %v785
    %v791 = vld [vmem:[#allocation5] sm:$0x1]
    %v792 = vmul.f32 %v420, %v790
    %v794 = vperm.slane %v791, 0
    %v796 = vmul.f32 %v794, %v792
    %v797 = vld [vmem:[%s2] sm:$0x1]
    %v799 = vperm.slane %v797, 0
    %v801 = vadd.f32 %v796, %v799
    %802 = vst [vmem:[#allocation8] sm:$0xf] %v801
    // Predicated region
    $region30: #{tpu_custom_call.1} parent=1 // pred_check
      _
    $region31: #{tpu_custom_call.1} parent=1 // pred_check_branch
      %804 = sbr.rel (0) target = $region33
    $region32: #{tpu_custom_call.1} parent=1 // pred_region
      %806 = vsyncadd [#allocation4], 0
      %s808 = sshll.u32 [#allocation8], 4
      %s809 = int_to_ptr.vmem [resolvable:$true] %s808
      %s810 = sshll.u32 %s4, 4
      %s811 = int_to_ptr.hbm [resolvable:$true] %s810
      %813 = dma.vmem_to_hbm [thread:$0]  %s809, 64, %s811, [#allocation4]
    $region33: #{tpu_custom_call.1} parent=1 // pred_fallthru
      _
    // Predicated region
    $region34: #{tpu_custom_call.1} parent=1 // pred_check
      _
    $region35: #{tpu_custom_call.1} parent=1 // pred_check_branch
      %815 = sbr.rel (0) target = $region37
    $region36: #{tpu_custom_call.1} parent=1 // pred_region
      %817 = dma.done [#allocation4], 64
    $region37: #{tpu_custom_call.1} parent=1 // pred_fallthru
      _
    %818 = vsyncpa [#allocation3], 1
    %819 = vsyncpa [#allocation6], 1
    %820 = vsyncpa [#allocation4], 1

</llo_original>
